<compile_context>
chip_gen: v5e
topology: v5e:2x2
jax: 0.10.0
libtpu: 0.0.40
codegen_flags: <defaults>
</compile_context>

<pallas_src>
import functools
import math

import jax
import jax.numpy as jnp
import numpy as np
from jax.experimental import pallas as pl
from jax.experimental.pallas import tpu as pltpu

BN_EPS = 1e-5
_VMEM_LIMIT = 32 * 1024 * 1024  # scoped-VMEM cap; safe on v5e/v6e/v7x


def _round_up(x, m):
    return ((x + m - 1) // m) * m


# --------------------------------------------------------------------------
# Kernel 1: out = relu((x @ w) * scale + shift)
#   x / w are the row-folded (lane-dense) views; scale/shift fold the BN
#   (scale = gamma*rsqrt(var+eps), shift = beta - mean*scale) into one FMA.
# --------------------------------------------------------------------------
def _fc_bn_relu_kernel(x_ref, w_ref, scale_ref, shift_ref, o_ref):
    y = jnp.dot(x_ref[...], w_ref[...], preferred_element_type=jnp.float32)
    o_ref[...] = jnp.maximum(y * scale_ref[...] + shift_ref[...], 0.0).astype(o_ref.dtype)


def fc_bn_relu(feat, w_t, gamma, beta, *, tm=1024):
    """ReLU(BatchNorm(feat @ w_t)) with training-mode (biased) batch stats.

    Returns bf16 [N, cout] (feeds straight into the bf16 segment-pool read).
    """
    n, cin = feat.shape
    cout = w_t.shape[1]
    x32 = feat.astype(jnp.float32)
    w32 = w_t.astype(jnp.float32)

    # ---- BN batch stats from colsum(x) and Gram = x^T x (no N x Cout pass) ----
    # mean_j   = (colsum @ w)_j / n
    # E[y^2]_j = (w_:j^T Gram w_:j) / n
    colsum = jnp.sum(x32, axis=0, keepdims=True)                      # (1, cin)
    gram = x32.T @ x32                                                # (cin, cin)
    inv_n = 1.0 / float(n)
    mean = (colsum @ w32) * inv_n                                     # (1, cout)
    ey2 = jnp.sum((gram @ w32) * w32, axis=0, keepdims=True) * inv_n  # (1, cout)
    # guard vs. cancellation; for N in the millions consider a two-pass variance
    var = jnp.maximum(ey2 - mean * mean, 0.0)
    scale = gamma.astype(jnp.float32) * jax.lax.rsqrt(var + BN_EPS)
    shift = beta.astype(jnp.float32) - mean * scale

    # ---- fold rows into lanes so both the x read and the y write are lane-dense
    cin_pad = _round_up(cin, 8)
    fold = max(1, 128 // math.gcd(cin_pad, 128))      # fold*cin_pad % 128 == 0
    rows = -(-n // fold)
    # cap tile so the f32 intermediate stays ~4 MiB
    cap = max(8, (((1 << 22) // (4 * fold * cout)) // 8) * 8)
    tm_f = min(tm, cap, _round_up(rows, 8))
    rows_pad = _round_up(rows, tm_f)
    n_pad = rows_pad * fold
    num_tiles = rows_pad // tm_f

    x_pad = jnp.zeros((n_pad, cin_pad), jnp.bfloat16).at[:n, :cin].set(
        feat.astype(jnp.bfloat16))
    x_fold = x_pad.reshape(rows_pad, fold * cin_pad)                  # lane-dense slab
    w_pad = jnp.zeros((cin_pad, cout), jnp.float32).at[:cin].set(w32)
    w_fold = jnp.kron(jnp.eye(fold, dtype=jnp.float32), w_pad).astype(jnp.bfloat16)
    scale_f = jnp.tile(scale, (1, fold))
    shift_f = jnp.tile(shift, (1, fold))

    out = pl.pallas_call(
        _fc_bn_relu_kernel,
        out_shape=jax.ShapeDtypeStruct((rows_pad, fold * cout), jnp.bfloat16),
        grid=(num_tiles,),
        in_specs=[pl.BlockSpec((tm_f, fold * cin_pad), lambda i: (i, 0)),
                  pl.BlockSpec((fold * cin_pad, fold * cout), lambda i: (0, 0)),
                  pl.BlockSpec((1, fold * cout), lambda i: (0, 0)),
                  pl.BlockSpec((1, fold * cout), lambda i: (0, 0))],
        out_specs=pl.BlockSpec((tm_f, fold * cout), lambda i: (i, 0)),
        compiler_params=pltpu.CompilerParams(
            dimension_semantics=("parallel",),        # independent row tiles (megacore)
            vmem_limit_bytes=_VMEM_LIMIT),
    )(x_fold, w_fold, scale_f, shift_f)

    # fold*cout output columns are exactly the row-major reshape of [n_pad, cout]
    return out.reshape(n_pad, cout)[:n]               # bf16


# --------------------------------------------------------------------------
# Kernel 2: contiguous-segment pooling over sorted cluster ids.
#   grid = (channel blocks, row tiles); resident accumulators (grid "arbitrary"):
#     coord_o : [M_pad, 8]      cols 0..2 = coord mean, col 3 = count
#     feat_o  : [M_pad, c_blk]  segment max (one channel block resident at a time)
# --------------------------------------------------------------------------
def _segment_pool_kernel(base_ref, seg_ref, coordc_ref, feat_ref,
                         coord_o_ref, feat_o_ref, *, tn_seg):
    cb = pl.program_id(0)                    # channel block (outer)
    rt = pl.program_id(1)                    # row tile (inner)

    @pl.when(jnp.logical_and(cb == 0, rt == 0))
    def _init_coord():
        coord_o_ref[...] = jnp.zeros_like(coord_o_ref)

    @pl.when(rt == 0)                        # fresh output block for every cb
    def _init_feat():
        feat_o_ref[...] = jnp.full(feat_o_ref.shape, -jnp.inf, feat_o_ref.dtype)

    base = pl.multiple_of(base_ref[rt], 8)   # 8-aligned segment base of this tile
    seg_lanes = seg_ref[...]                 # (1, tn) int32, non-decreasing
    tn = seg_lanes.shape[1]
    local = seg_lanes - base                 # local segment id per lane
    sid = jax.lax.broadcasted_iota(jnp.int32, (tn_seg, tn), 0)
    member = sid == local                    # (tn_seg, tn) one-hot membership
    memberf = member.astype(jnp.float32)     # exact 0/1

    # ---- coord sum + point count via one small MXU matmul (kept f32: coords) ----
    coordc = coordc_ref[...]                 # (tn, 8): [x, y, z, 1(count), seg, 0, 0, 0]
    sums = jnp.dot(memberf, coordc, preferred_element_type=jnp.float32)  # (tn_seg, 8)
    present = sums[:, 3:4] > 0.5             # segment has >=1 row in this tile

    @pl.when(cb == 0)                        # coords accumulated once, not per c-block
    def _acc_coord():
        win = coord_o_ref[pl.ds(base, tn_seg), :]
        coord_o_ref[pl.ds(base, tn_seg), :] = win + sums

    # ---- segmented running max along rows (Hillis–Steele, log2(tn) steps) -------
    # seg id per row comes from coordc col 4 (float; exact for < 2**24 clusters).
    seg_rows = coordc[:, 4:5]                                      # (tn, 1)
    rowidx = jax.lax.broadcasted_iota(jnp.int32, (tn, 1), 0)
    run = feat_ref[...].astype(jnp.float32)                        # (tn, c_blk)
    d = 1
    while d < tn:                            # static unroll; rolls hit the XLU
        same = seg_rows == jnp.roll(seg_rows, d, axis=0)
        ok = jnp.logical_and(rowidx >= d, same)
        run = jnp.where(ok, jnp.maximum(run, jnp.roll(run, d, axis=0)), run)
        d *= 2

    # ---- pick the tile-local last row of each segment with a one-hot matmul -----
    lane = jax.lax.broadcasted_iota(jnp.int32, (1, tn), 1)
    is_last = jnp.logical_or(lane == tn - 1,
                             seg_lanes != jnp.roll(seg_lanes, -1, axis=1))
    last_oh = jnp.logical_and(member, is_last).astype(jnp.float32)  # (tn_seg, tn)
    sel = jnp.dot(last_oh, run, preferred_element_type=jnp.float32)  # exact selection
    local_max = jnp.where(present, sel, -jnp.inf)

    cur = feat_o_ref[pl.ds(base, tn_seg), :]
    feat_o_ref[pl.ds(base, tn_seg), :] = jnp.maximum(cur, local_max)

    # ---- finalize: divide coord sums by counts (exact division) -----------------
    @pl.when(jnp.logical_and(cb == 0, rt == pl.num_programs(1) - 1))
    def _finalize():
        acc = coord_o_ref[...]
        cnt = jnp.maximum(acc[:, 3:4], 1.0)  # padded segments have count 0
        coord_o_ref[...] = acc / cnt


def segment_pool(seg_sorted, sorted_idx, coord, feat, num_segments, *,
                 tn=512, c_blk=128):
    """mean(coord) / max(feat) over sorted, contiguous segments (segment_csr)."""
    n = coord.shape[0]
    c = feat.shape[1]
    tn = min(tn, _round_up(n, 8))
    n_pad = _round_up(n, tn)
    num_tiles = n_pad // tn
    tn_seg = tn + 8                                   # head-room for 8-aligned base
    m_pad = _round_up(num_segments + 1, 8) + tn_seg   # slack for the pl.ds window

    if c <= c_blk:
        c_blk, c_pad = c, c
    else:
        c_pad = _round_up(c, c_blk)
    num_cblk = c_pad // c_blk
    # TODO(synk): for very large M*C on v7x, window the feat output BlockSpec by the
    # scalar-prefetched tile base (input_output_aliases) instead of keeping [M, c_blk]
    # resident, and add a megacore split of the row-tile axis.

    # gathers through index arrays already padded to n_pad (pad rows -> appended zero row)
    idx_pad = jnp.full((n_pad,), n, jnp.int32).at[:n].set(sorted_idx.astype(jnp.int32))
    seg_p = jnp.full((n_pad,), num_segments, jnp.int32).at[:n].set(
        seg_sorted.astype(jnp.int32))

    coord_ext = jnp.concatenate([coord.astype(jnp.float32),
                                 jnp.zeros((1, 3), jnp.float32)], axis=0)
    coord_g = jnp.take(coord_ext, idx_pad, axis=0)                    # (n_pad, 3) f32
    feat_ext = jnp.concatenate([feat.astype(jnp.bfloat16),
                                jnp.zeros((1, c), jnp.bfloat16)], axis=0)
    feat_g = jnp.take(feat_ext, idx_pad, axis=0)                      # (n_pad, c) bf16
    if c_pad != c:
        feat_g = jnp.pad(feat_g, ((0, 0), (0, c_pad - c)))

    cnt_col = (jnp.arange(n_pad) < n).astype(jnp.float32)[:, None]
    segf_col = seg_p.astype(jnp.float32)[:, None]     # exact for < 2**24 clusters
    coordc = jnp.concatenate(
        [coord_g, cnt_col, segf_col, jnp.zeros((n_pad, 3), jnp.float32)], axis=1)

    seg2d = seg_p.reshape(1, n_pad)
    tile_base = ((seg_p[::tn] // 8) * 8).astype(jnp.int32)            # (num_tiles,)

    kernel = functools.partial(_segment_pool_kernel, tn_seg=tn_seg)
    grid_spec = pltpu.PrefetchScalarGridSpec(
        num_scalar_prefetch=1,
        grid=(num_cblk, num_tiles),
        in_specs=[
            pl.BlockSpec((1, tn), lambda cb, rt, tb: (0, rt)),
            pl.BlockSpec((tn, 8), lambda cb, rt, tb: (rt, 0)),
            pl.BlockSpec((tn, c_blk), lambda cb, rt, tb: (rt, cb)),
        ],
        out_specs=(
            pl.BlockSpec((m_pad, 8), lambda cb, rt, tb: (0, 0)),
            pl.BlockSpec((m_pad, c_blk), lambda cb, rt, tb: (0, cb)),
        ),
    )
    coord_o, feat_o = pl.pallas_call(
        kernel,
        grid_spec=grid_spec,
        out_shape=(jax.ShapeDtypeStruct((m_pad, 8), jnp.float32),
                   jax.ShapeDtypeStruct((m_pad, c_pad), jnp.float32)),
        compiler_params=pltpu.CompilerParams(
            # boundary segments span row tiles -> sequential RMW accumulation
            dimension_semantics=("arbitrary", "arbitrary"),
            vmem_limit_bytes=_VMEM_LIMIT),
    )(tile_base, seg2d, coordc, feat_g)

    return coord_o[:num_segments, :3], feat_o[:num_segments, :c]


# --------------------------------------------------------------------------
# Full GridPool.forward
# --------------------------------------------------------------------------
def grid_pool_forward(coord, feat, offset, params, grid_size):
    offset = offset.astype(jnp.int32)
    num_batches = int(offset.shape[0])
    n = coord.shape[0]

    # offset2batch
    per_batch = jnp.diff(jnp.concatenate([jnp.zeros((1,), jnp.int32), offset]))
    batch = jnp.repeat(jnp.arange(num_batches, dtype=jnp.int32), per_batch,
                       total_repeat_length=n)

    # feat = act(norm(fc(feat)))  -- Pallas kernel 1 (bf16 output)
    feat2 = fc_bn_relu(feat, params["w_t"], params["gamma"], params["beta"])

    # start = per-batch min coordinate (segment_csr(..., 'min'))
    start = jax.ops.segment_min(coord, batch, num_segments=num_batches)

    # voxel_grid(pos=coord - start[batch], size=grid_size, batch=batch, start=0)
    # TODO(synk): int32 voxel key can overflow for huge scenes / very fine grids.
    vox = jnp.floor((coord - start[batch]) / grid_size).astype(jnp.int32)
    nvox = jnp.max(vox, axis=0) + 1
    key = (vox[:, 0]
           + vox[:, 1] * nvox[0]
           + vox[:, 2] * nvox[0] * nvox[1]
           + batch * nvox[0] * nvox[1] * nvox[2])

    # unique (sorted) + inverse + counts  (dynamic output size -> eager glue)
    unique, cluster, counts = jnp.unique(key, return_inverse=True, return_counts=True)
    cluster = cluster.reshape(-1).astype(jnp.int32)
    m = int(unique.shape[0])

    sorted_idx = jnp.argsort(cluster).astype(jnp.int32)
    seg_sorted = cluster[sorted_idx]

    # segment mean(coord) / max(feat) -- Pallas kernel 2 (pad-fused gathers inside)
    coord_out, feat_out = segment_pool(seg_sorted, sorted_idx, coord, feat2, m)

    # batch of each cluster (first element of each segment), then batch2offset
    idx_ptr = jnp.concatenate([jnp.zeros((1,), counts.dtype), jnp.cumsum(counts)])
    batch_out = batch[sorted_idx][idx_ptr[:-1]]
    offset_out = jnp.cumsum(jnp.bincount(batch_out, length=num_batches)).astype(jnp.int32)

    return (coord_out, feat_out, offset_out), cluster


# --------------------------------------------------------------------------
# Pure-JAX reference for sanity checking the kernels
# --------------------------------------------------------------------------
def _reference(coord, feat, w, cluster, m):
    y = feat @ w.T
    mean = y.mean(0, keepdims=True)
    var = ((y - mean) ** 2).mean(0, keepdims=True)
    f = jnp.maximum((y - mean) / jnp.sqrt(var + BN_EPS), 0.0)
    cnt = jax.ops.segment_sum(jnp.ones((coord.shape[0],), jnp.float32), cluster, m)
    coord_mean = jax.ops.segment_sum(coord, cluster, m) / cnt[:, None]
    feat_max = jax.ops.segment_max(f, cluster, m)
    return coord_mean, feat_max


if __name__ == "__main__":
    N, C_IN, C_OUT = 64, 6, 32
    GRID_SIZE = 0.25

    key = jax.random.PRNGKey(0)
    k1, k2, k3 = jax.random.split(key, 3)

    coord = jax.random.uniform(k1, (N, 3), jnp.float32)          # coords in [0, 1)^3
    feat = jax.random.normal(k2, (N, C_IN), jnp.float32)
    offset = jnp.array([40, 64], dtype=jnp.int32)                # 2 point clouds: 40 + 24 points

    # nn.Linear(in, out, bias=False) weight [out, in]; BN gamma=1, beta=0 (fresh module)
    bound = 1.0 / math.sqrt(C_IN)
    w = jax.random.uniform(k3, (C_OUT, C_IN), jnp.float32, -bound, bound)
    params = {
        "w_t": w.T,
        "gamma": jnp.ones((1, C_OUT), jnp.float32),
        "beta": jnp.zeros((1, C_OUT), jnp.float32),
    }

    (coord_out, feat_out, offset_out), cluster = grid_pool_forward(
        coord, feat, offset, params, GRID_SIZE)
    jax.block_until_ready((coord_out, feat_out, offset_out, cluster))

    # sanity check against a pure-JAX reference
    m = int(coord_out.shape[0])
    coord_ref, feat_ref = _reference(coord, feat, w, cluster, m)
    # coord path is f32 end-to-end -> tight; feat path uses bf16 matmul operands
    # and bf16 feature storage (per perf review) -> looser tolerance.
    np.testing.assert_allclose(np.asarray(coord_out), np.asarray(coord_ref),
                               rtol=1e-4, atol=1e-4)
    np.testing.assert_allclose(np.asarray(feat_out), np.asarray(feat_ref),
                               rtol=2e-2, atol=2e-2)

    print("KERNEL_OK")
</pallas_src>

<mosaic_0001>
module attributes {stable_mosaic.version = 11 : i64} {
  func.func @_fc_bn_relu_kernel(%arg0: i32, %arg1: memref<8x128xbf16, #tpu.memory_space<vmem>>, %arg2: memref<128x512xbf16, #tpu.memory_space<vmem>>, %arg3: memref<1x512xf32, #tpu.memory_space<vmem>>, %arg4: memref<1x512xf32, #tpu.memory_space<vmem>>, %arg5: memref<8x512xbf16, #tpu.memory_space<vmem>>) attributes {dimension_semantics = [#tpu.dimension_semantics<parallel>], iteration_bounds = array<i64: 1>, scalar_prefetch = 0 : i64, scratch_operands = 0 : i64, tpu.core_type = #tpu.core_type<tc>, window_params = [{transform_indices = @transform_0, window_bounds = array<i64: 8, 128>}, {pipeline_mode = #tpu.pipeline_mode<synchronous>, transform_indices = @transform_1, window_bounds = array<i64: 128, 512>}, {pipeline_mode = #tpu.pipeline_mode<synchronous>, transform_indices = @transform_2, window_bounds = array<i64: 1, 512>}, {pipeline_mode = #tpu.pipeline_mode<synchronous>, transform_indices = @transform_3, window_bounds = array<i64: 1, 512>}, {transform_indices = @transform_4, window_bounds = array<i64: 8, 512>}]} {
    %c0 = arith.constant 0 : index
    %c0_0 = arith.constant 0 : index
    %0 = vector.load %arg1[%c0, %c0_0] : memref<8x128xbf16, #tpu.memory_space<vmem>>, vector<8x128xbf16>
    %c0_1 = arith.constant 0 : index
    %c0_2 = arith.constant 0 : index
    %1 = vector.load %arg2[%c0_1, %c0_2] : memref<128x512xbf16, #tpu.memory_space<vmem>>, vector<128x512xbf16>
    %cst = arith.constant dense<0.000000e+00> : vector<8x512xf32>
    %2 = tpu.matmul %0, %1, %cst {dimension_numbers = #tpu.dot_dimension_numbers<[1], [0], [0], [1], [0, 0, 1, 1], [], []>} : vector<8x128xbf16>, vector<128x512xbf16>, vector<8x512xf32> -> vector<8x512xf32>
    %c0_3 = arith.constant 0 : index
    %c0_4 = arith.constant 0 : index
    %3 = vector.load %arg3[%c0_3, %c0_4] : memref<1x512xf32, #tpu.memory_space<vmem>>, vector<1x512xf32>
    %4 = vector.broadcast %3 : vector<1x512xf32> to vector<8x512xf32>
    %5 = arith.mulf %2, %4 : vector<8x512xf32>
    %c0_5 = arith.constant 0 : index
    %c0_6 = arith.constant 0 : index
    %6 = vector.load %arg4[%c0_5, %c0_6] : memref<1x512xf32, #tpu.memory_space<vmem>>, vector<1x512xf32>
    %7 = vector.broadcast %6 : vector<1x512xf32> to vector<8x512xf32>
    %8 = arith.addf %5, %7 : vector<8x512xf32>
    %cst_7 = arith.constant 0.000000e+00 : f32
    %9 = vector.broadcast %cst_7 : f32 to vector<8x512xf32>
    %10 = arith.maximumf %8, %9 : vector<8x512xf32>
    %11 = arith.truncf %10 : vector<8x512xf32> to vector<8x512xbf16>
    %c0_8 = arith.constant 0 : index
    %c0_9 = arith.constant 0 : index
    %12 = vector.load %arg5[%c0_8, %c0_9] : memref<8x512xbf16, #tpu.memory_space<vmem>>, vector<8x512xbf16>
    tpu.vector_store %arg5[%c0_8, %c0_9], %11 {strides = array<i32>} : memref<8x512xbf16, #tpu.memory_space<vmem>>, vector<8x512xbf16>,
    return
  }
  func.func @transform_0(%arg0: i32) -> (i32, i32) {
    %c0_i32 = arith.constant 0 : i32
    %c0_i32_0 = arith.constant 0 : i32
    return %arg0, %c0_i32 : i32, i32
  }
  func.func @transform_1(%arg0: i32) -> (i32, i32) {
    %c0_i32 = arith.constant 0 : i32
    %c0_i32_0 = arith.constant 0 : i32
    %c0_i32_1 = arith.constant 0 : i32
    return %c0_i32, %c0_i32_0 : i32, i32
  }
  func.func @transform_2(%arg0: i32) -> (i32, i32) {
    %c0_i32 = arith.constant 0 : i32
    %c0_i32_0 = arith.constant 0 : i32
    %c0_i32_1 = arith.constant 0 : i32
    return %c0_i32, %c0_i32_0 : i32, i32
  }
  func.func @transform_3(%arg0: i32) -> (i32, i32) {
    %c0_i32 = arith.constant 0 : i32
    %c0_i32_0 = arith.constant 0 : i32
    %c0_i32_1 = arith.constant 0 : i32
    return %c0_i32, %c0_i32_0 : i32, i32
  }
  func.func @transform_4(%arg0: i32) -> (i32, i32) {
    %c0_i32 = arith.constant 0 : i32
    %c0_i32_0 = arith.constant 0 : i32
    return %arg0, %c0_i32 : i32, i32
  }
}

</mosaic_0001>

<llo_original>
// kernel: tpu_custom_call.1
$region0: #{tpu_custom_call.1}
  #allocation0 [shape = 'u32[]', space=smem, size = 0x4, offset = 0x4, fixed_abs, tag = 'smem constant byte address 0x4 - core index']
  #allocation1 [shape = 'u32[72,128]{1,0:T(1,128)}', space=vmem, size = 0x9000, scoped, tag = 'internal scratch']
  %s0 = inlined_call_operand.hbm [shape: bf16[8,128], index: 0, kind: input, shape index: {}]
  %s1 = inlined_call_operand.hbm [shape: bf16[128,512], index: 1, kind: input, shape index: {}]
  %s2 = inlined_call_operand.hbm [shape: f32[1,512], index: 2, kind: input, shape index: {}]
  %s3 = inlined_call_operand.hbm [shape: f32[1,512], index: 3, kind: input, shape index: {}]
  %s4 = inlined_call_operand.hbm [shape: bf16[8,512], index: 4, kind: output, shape index: {}]
  %s5 = sld [smem:[#allocation0]]
  $region42: #{tpu_custom_call.1} parent=0
    _
  %s7 = ssub.s32 1, %s5
  %s8 = scalar_select 0, %s7, %s5
  $region1: #{tpu_custom_call.1} parent=0
    #allocation2 [shape = 'u8[2048]{0}', space=vmem, size = 0x800, scoped, tag = 'input window, operand 0, single buffered']
    #allocation3 [shape = 's32[1]{0}', space=sflag, size = 0x4, scoped, tag = 'scoped memory for tpu_custom_call.1']
    #allocation4 [shape = 's32[1]{0}', space=sflag, size = 0x4, scoped, tag = 'scoped memory for tpu_custom_call.1']
    #allocation5 [shape = 'u8[131072]{0}', space=vmem, size = 0x20000, scoped, tag = 'input window, operand 1, single buffered']
    #allocation6 [shape = 's32[1]{0}', space=sflag, size = 0x4, scoped, tag = 'scoped memory for tpu_custom_call.1']
    #allocation7 [shape = 'u8[2048]{0}', space=vmem, size = 0x800, scoped, tag = 'input window, operand 2, single buffered']
    #allocation8 [shape = 'u8[2048]{0}', space=vmem, size = 0x800, scoped, tag = 'input window, operand 3, single buffered']
    #allocation9 [shape = 's32[1]{0}', space=sflag, size = 0x4, scoped, tag = 'scoped memory for tpu_custom_call.1']
    #allocation10 [shape = 'u8[8192]{0}', space=vmem, size = 0x2000, scoped, tag = 'output window, operand 0, single buffered']
    %9 = vsyncpa [#allocation3], 0
    %10 = vsyncpa [#allocation6], 0
    %11 = vsyncpa [#allocation9], 0
    %12 = vsyncpa [#allocation4], 0
    // Predicated region
    $region2: #{tpu_custom_call.1} parent=1 // pred_check
      _
    $region3: #{tpu_custom_call.1} parent=1 // pred_check_branch
      %14 = sbr.rel (0) target = $region5
    $region4: #{tpu_custom_call.1} parent=1 // pred_region
      %16 = vsyncadd [#allocation3], 0
      %s18 = sshll.u32 %s0, 4
      %s19 = int_to_ptr.hbm [resolvable:$true] %s18
      %s20 = sshll.u32 [#allocation2], 4
      %s21 = int_to_ptr.vmem [resolvable:$true] %s20
      %23 = dma.hbm_to_vmem [thread:$0]  %s19, 64, %s21, [#allocation3]
    $region5: #{tpu_custom_call.1} parent=1 // pred_fallthru
      _
    // Predicated region
    $region6: #{tpu_custom_call.1} parent=1 // pred_check
      _
    $region7: #{tpu_custom_call.1} parent=1 // pred_check_branch
      %25 = sbr.rel (0) target = $region9
    $region8: #{tpu_custom_call.1} parent=1 // pred_region
      %27 = vsyncadd [#allocation6], 0
      %s28 = sshll.u32 %s1, 4
      %s29 = int_to_ptr.hbm [resolvable:$true] %s28
      %s30 = sshll.u32 [#allocation5], 4
      %s31 = int_to_ptr.vmem [resolvable:$true] %s30
      %36 = dma.hbm_to_vmem [thread:$0]  %s29, 4096, %s31, [#allocation6], 256, 256, 16
    $region9: #{tpu_custom_call.1} parent=1 // pred_fallthru
      _
    // Predicated region
    $region10: #{tpu_custom_call.1} parent=1 // pred_check
      _
    $region11: #{tpu_custom_call.1} parent=1 // pred_check_branch
      %38 = sbr.rel (0) target = $region13
    $region12: #{tpu_custom_call.1} parent=1 // pred_region
      %40 = vsyncadd [#allocation6], 0
      %s42 = sshll.u32 %s2, 4
      %s43 = int_to_ptr.hbm [resolvable:$true] %s42
      %s44 = sshll.u32 [#allocation7], 4
      %s45 = int_to_ptr.vmem [resolvable:$true] %s44
      %47 = dma.hbm_to_vmem [thread:$0]  %s43, 64, %s45, [#allocation6]
    $region13: #{tpu_custom_call.1} parent=1 // pred_fallthru
      _
    // Predicated region
    $region14: #{tpu_custom_call.1} parent=1 // pred_check
      _
    $region15: #{tpu_custom_call.1} parent=1 // pred_check_branch
      %49 = sbr.rel (0) target = $region17
    $region16: #{tpu_custom_call.1} parent=1 // pred_region
      %51 = vsyncadd [#allocation9], 0
      %s53 = sshll.u32 %s3, 4
      %s54 = int_to_ptr.hbm [resolvable:$true] %s53
      %s55 = sshll.u32 [#allocation8], 4
      %s56 = int_to_ptr.vmem [resolvable:$true] %s55
      %58 = dma.hbm_to_vmem [thread:$0]  %s54, 64, %s56, [#allocation9]
    $region17: #{tpu_custom_call.1} parent=1 // pred_fallthru
      _
    // Predicated region
    $region18: #{tpu_custom_call.1} parent=1 // pred_check
      _
    $region19: #{tpu_custom_call.1} parent=1 // pred_check_branch
      %60 = sbr.rel (0) target = $region21
    $region20: #{tpu_custom_call.1} parent=1 // pred_region
      %62 = dma.done [#allocation3], 64
    $region21: #{tpu_custom_call.1} parent=1 // pred_fallthru
      _
    // Predicated region
    $region22: #{tpu_custom_call.1} parent=1 // pred_check
      _
    $region23: #{tpu_custom_call.1} parent=1 // pred_check_branch
      %64 = sbr.rel (0) target = $region25
    $region24: #{tpu_custom_call.1} parent=1 // pred_region
      %66 = dma.done [#allocation6], 4096
    $region25: #{tpu_custom_call.1} parent=1 // pred_fallthru
      _
    // Predicated region
    $region26: #{tpu_custom_call.1} parent=1 // pred_check
      _
    $region27: #{tpu_custom_call.1} parent=1 // pred_check_branch
      %68 = sbr.rel (0) target = $region29
    $region28: #{tpu_custom_call.1} parent=1 // pred_region
      %70 = dma.done [#allocation6], 64
    $region29: #{tpu_custom_call.1} parent=1 // pred_fallthru
      _
    // Predicated region
    $region30: #{tpu_custom_call.1} parent=1 // pred_check
      _
    $region31: #{tpu_custom_call.1} parent=1 // pred_check_branch
      %72 = sbr.rel (0) target = $region33
    $region32: #{tpu_custom_call.1} parent=1 // pred_region
      %74 = dma.done [#allocation9], 64
    $region33: #{tpu_custom_call.1} parent=1 // pred_fallthru
      _
    %v75 = vld [vmem:[#allocation2] sm:$0xf]
    %v76 = vld [vmem:[#allocation5] sm:$0xff]
    %v77 = vld [vmem:[#allocation5 + $0x8] sm:$0xff]
    %v78 = vld [vmem:[#allocation5 + $0x10] sm:$0xff]
    %v79 = vld [vmem:[#allocation5 + $0x18] sm:$0xff]
    %v80 = vld [vmem:[#allocation5 + $0x20] sm:$0xff]
    %v81 = vld [vmem:[#allocation5 + $0x28] sm:$0xff]
    %v82 = vld [vmem:[#allocation5 + $0x30] sm:$0xff]
    %v83 = vld [vmem:[#allocation5 + $0x38] sm:$0xff]
    %v84 = vld [vmem:[#allocation5 + $0x40] sm:$0xff]
    %v85 = vld [vmem:[#allocation5 + $0x48] sm:$0xff]
    %v86 = vld [vmem:[#allocation5 + $0x50] sm:$0xff]
    %v87 = vld [vmem:[#allocation5 + $0x58] sm:$0xff]
    %v88 = vld [vmem:[#allocation5 + $0x60] sm:$0xff]
    %v89 = vld [vmem:[#allocation5 + $0x68] sm:$0xff]
    %v90 = vld [vmem:[#allocation5 + $0x70] sm:$0xff]
    %v91 = vld [vmem:[#allocation5 + $0x78] sm:$0xff]
    %v92 = vld [vmem:[#allocation5 + $0x80] sm:$0xff]
    %v93 = vld [vmem:[#allocation5 + $0x88] sm:$0xff]
    %v94 = vld [vmem:[#allocation5 + $0x90] sm:$0xff]
    %v95 = vld [vmem:[#allocation5 + $0x98] sm:$0xff]
    %v96 = vld [vmem:[#allocation5 + $0xa0] sm:$0xff]
    %v97 = vld [vmem:[#allocation5 + $0xa8] sm:$0xff]
    %v98 = vld [vmem:[#allocation5 + $0xb0] sm:$0xff]
    %v99 = vld [vmem:[#allocation5 + $0xb8] sm:$0xff]
    %v100 = vld [vmem:[#allocation5 + $0xc0] sm:$0xff]
    %v101 = vld [vmem:[#allocation5 + $0xc8] sm:$0xff]
    %v102 = vld [vmem:[#allocation5 + $0xd0] sm:$0xff]
    %v103 = vld [vmem:[#allocation5 + $0xd8] sm:$0xff]
    %v104 = vld [vmem:[#allocation5 + $0xe0] sm:$0xff]
    %v105 = vld [vmem:[#allocation5 + $0xe8] sm:$0xff]
    %v106 = vld [vmem:[#allocation5 + $0xf0] sm:$0xff]
    %v107 = vld [vmem:[#allocation5 + $0xf8] sm:$0xff]
    %v140 = vunpack.c.l.b16 %v76
    %v141 = vunpack.c.h.b16 %v76
    %v142 = vunpack.c.l.b16 %v77
    %v143 = vunpack.c.h.b16 %v77
    %v144 = vunpack.c.l.b16 %v78
    %v145 = vunpack.c.h.b16 %v78
    %v146 = vunpack.c.l.b16 %v79
    %v147 = vunpack.c.h.b16 %v79
    %v148 = vunpack.c.l.b16 %v80
    %v149 = vunpack.c.h.b16 %v80
    %v150 = vunpack.c.l.b16 %v81
    %v151 = vunpack.c.h.b16 %v81
    %v152 = vunpack.c.l.b16 %v82
    %v153 = vunpack.c.h.b16 %v82
    %v154 = vunpack.c.l.b16 %v83
    %v155 = vunpack.c.h.b16 %v83
    %v156 = vunpack.c.l.b16 %v84
    %v157 = vunpack.c.h.b16 %v84
    %v158 = vunpack.c.l.b16 %v85
    %v159 = vunpack.c.h.b16 %v85
    %v160 = vunpack.c.l.b16 %v86
    %v161 = vunpack.c.h.b16 %v86
    %v162 = vunpack.c.l.b16 %v87
    %v163 = vunpack.c.h.b16 %v87
    %v164 = vunpack.c.l.b16 %v88
    %v165 = vunpack.c.h.b16 %v88
    %v166 = vunpack.c.l.b16 %v89
    %v167 = vunpack.c.h.b16 %v89
    %v168 = vunpack.c.l.b16 %v90
    %v169 = vunpack.c.h.b16 %v90
    %v170 = vunpack.c.l.b16 %v91
    %v171 = vunpack.c.h.b16 %v91
    %v172 = vunpack.c.l.b16 %v92
    %v173 = vunpack.c.h.b16 %v92
    %v174 = vunpack.c.l.b16 %v93
    %v175 = vunpack.c.h.b16 %v93
    %v176 = vunpack.c.l.b16 %v94
    %v177 = vunpack.c.h.b16 %v94
    %v178 = vunpack.c.l.b16 %v95
    %v179 = vunpack.c.h.b16 %v95
    %v180 = vunpack.c.l.b16 %v96
    %v181 = vunpack.c.h.b16 %v96
    %v182 = vunpack.c.l.b16 %v97
    %v183 = vunpack.c.h.b16 %v97
    %v184 = vunpack.c.l.b16 %v98
    %v185 = vunpack.c.h.b16 %v98
    %v186 = vunpack.c.l.b16 %v99
    %v187 = vunpack.c.h.b16 %v99
    %v188 = vunpack.c.l.b16 %v100
    %v189 = vunpack.c.h.b16 %v100
    %v190 = vunpack.c.l.b16 %v101
    %v191 = vunpack.c.h.b16 %v101
    %v192 = vunpack.c.l.b16 %v102
    %v193 = vunpack.c.h.b16 %v102
    %v194 = vunpack.c.l.b16 %v103
    %v195 = vunpack.c.h.b16 %v103
    %v196 = vunpack.c.l.b16 %v104
    %v197 = vunpack.c.h.b16 %v104
    %v198 = vunpack.c.l.b16 %v105
    %v199 = vunpack.c.h.b16 %v105
    %v200 = vunpack.c.l.b16 %v106
    %v201 = vunpack.c.h.b16 %v106
    %v202 = vunpack.c.l.b16 %v107
    %v203 = vunpack.c.h.b16 %v107
    %v204 = vpack.c.b16 %v144, %v140
    %v205 = vpack.c.b16 %v145, %v141
    %v206 = vpack.c.b16 %v146, %v142
    %v207 = vpack.c.b16 %v147, %v143
    %v208 = vpack.c.b16 %v152, %v148
    %v209 = vpack.c.b16 %v153, %v149
    %v210 = vpack.c.b16 %v154, %v150
    %v211 = vpack.c.b16 %v155, %v151
    %v212 = vpack.c.b16 %v160, %v156
    %v213 = vpack.c.b16 %v161, %v157
    %v214 = vpack.c.b16 %v162, %v158
    %v215 = vpack.c.b16 %v163, %v159
    %v216 = vpack.c.b16 %v168, %v164
    %v217 = vpack.c.b16 %v169, %v165
    %v218 = vpack.c.b16 %v170, %v166
    %v219 = vpack.c.b16 %v171, %v167
    %v220 = vpack.c.b16 %v176, %v172
    %v221 = vpack.c.b16 %v177, %v173
    %v222 = vpack.c.b16 %v178, %v174
    %v223 = vpack.c.b16 %v179, %v175
    %v224 = vpack.c.b16 %v184, %v180
    %v225 = vpack.c.b16 %v185, %v181
    %v226 = vpack.c.b16 %v186, %v182
    %v227 = vpack.c.b16 %v187, %v183
    %v228 = vpack.c.b16 %v192, %v188
    %v229 = vpack.c.b16 %v193, %v189
    %v230 = vpack.c.b16 %v194, %v190
    %v231 = vpack.c.b16 %v195, %v191
    %v232 = vpack.c.b16 %v200, %v196
    %v233 = vpack.c.b16 %v201, %v197
    %v234 = vpack.c.b16 %v202, %v198
    %v235 = vpack.c.b16 %v203, %v199
    %268 = vmatpush.bf16.msra.mxu0 %v232
    %269 = vmatpush.bf16.msra.mxu0 %v228
    %270 = vmatpush.bf16.msra.mxu0 %v224
    %271 = vmatpush.bf16.msra.mxu0 %v220
    %272 = vmatpush.bf16.msra.mxu0 %v216
    %273 = vmatpush.bf16.msra.mxu0 %v212
    %274 = vmatpush.bf16.msra.mxu0 %v208
    %275 = vmatpush.bf16.msra.mxu0 %v204
    %276 = vmatmul.bf16.gmra.mxu0 %v75
    %v277 = vpop.f32.mrf.mxu0
    %v278 = vadd.f32 0.0, %v277
    %v279 = vpop.f32.mrf.mxu0
    %280 = vdwg.mxu0
    %281 = vmatpush.bf16.msra.mxu0 %v233
    %282 = vmatpush.bf16.msra.mxu0 %v229
    %283 = vmatpush.bf16.msra.mxu0 %v225
    %284 = vmatpush.bf16.msra.mxu0 %v221
    %285 = vmatpush.bf16.msra.mxu0 %v217
    %286 = vmatpush.bf16.msra.mxu0 %v213
    %287 = vmatpush.bf16.msra.mxu0 %v209
    %288 = vmatpush.bf16.msra.mxu0 %v205
    %289 = vmatmul.bf16.gmra.mxu0 %v75
    %v290 = vpop.f32.mrf.mxu0
    %v291 = vadd.f32 0.0, %v290
    %v292 = vpop.f32.mrf.mxu0
    %293 = vdwg.mxu0
    %294 = vmatpush.bf16.msra.mxu0 %v234
    %295 = vmatpush.bf16.msra.mxu0 %v230
    %296 = vmatpush.bf16.msra.mxu0 %v226
    %297 = vmatpush.bf16.msra.mxu0 %v222
    %298 = vmatpush.bf16.msra.mxu0 %v218
    %299 = vmatpush.bf16.msra.mxu0 %v214
    %300 = vmatpush.bf16.msra.mxu0 %v210
    %301 = vmatpush.bf16.msra.mxu0 %v206
    %302 = vmatmul.bf16.gmra.mxu0 %v75
    %v303 = vpop.f32.mrf.mxu0
    %v304 = vadd.f32 0.0, %v303
    %v305 = vpop.f32.mrf.mxu0
    %306 = vdwg.mxu0
    %307 = vmatpush.bf16.msra.mxu0 %v235
    %308 = vmatpush.bf16.msra.mxu0 %v231
    %309 = vmatpush.bf16.msra.mxu0 %v227
    %310 = vmatpush.bf16.msra.mxu0 %v223
    %311 = vmatpush.bf16.msra.mxu0 %v219
    %312 = vmatpush.bf16.msra.mxu0 %v215
    %313 = vmatpush.bf16.msra.mxu0 %v211
    %314 = vmatpush.bf16.msra.mxu0 %v207
    %315 = vmatmul.bf16.gmra.mxu0 %v75
    %v316 = vpop.f32.mrf.mxu0
    %v317 = vadd.f32 0.0, %v316
    %v318 = vpop.f32.mrf.mxu0
    %319 = vdwg.mxu0
    %v320 = vld [vmem:[#allocation7] sm:$0xf]
    %v322 = vperm.slane %v320, 0
    %v323 = vperm.slane %v320, 1
    %v324 = vperm.slane %v320, 2
    %v325 = vperm.slane %v320, 3
    %v330 = vmul.f32 %v278, %v322
    %v331 = vmul.f32 %v291, %v323
    %v332 = vmul.f32 %v304, %v324
    %v333 = vmul.f32 %v317, %v325
    %v334 = vld [vmem:[#allocation8] sm:$0xf]
    %v336 = vperm.slane %v334, 0
    %v337 = vperm.slane %v334, 1
    %v338 = vperm.slane %v334, 2
    %v339 = vperm.slane %v334, 3
    %v344 = vadd.f32 %v330, %v336
    %v345 = vadd.f32 %v331, %v337
    %v346 = vadd.f32 %v332, %v338
    %v347 = vadd.f32 %v333, %v339
    %v348 = vmax.f32 %v344, 0.0
    %v349 = vmax.f32 %v345, 0.0
    %v350 = vmax.f32 %v346, 0.0
    %v351 = vmax.f32 %v347, 0.0
    %v352 = vpack.c.bf16 %v349, %v348
    %v353 = vpack.c.bf16 %v351, %v350
    %354 = vst [vmem:[#allocation10] sm:$0xff] %v352
    %355 = vst [vmem:[#allocation10 + $0x8] sm:$0xff] %v353
    // Predicated region
    $region34: #{tpu_custom_call.1} parent=1 // pred_check
      _
    $region35: #{tpu_custom_call.1} parent=1 // pred_check_branch
      %357 = sbr.rel (0) target = $region37
    $region36: #{tpu_custom_call.1} parent=1 // pred_region
      %359 = vsyncadd [#allocation4], 0
      %s361 = sshll.u32 [#allocation10], 4
      %s362 = int_to_ptr.vmem [resolvable:$true] %s361
      %s363 = sshll.u32 %s4, 4
      %s364 = int_to_ptr.hbm [resolvable:$true] %s363
      %366 = dma.vmem_to_hbm [thread:$0]  %s362, 256, %s364, [#allocation4]
    $region37: #{tpu_custom_call.1} parent=1 // pred_fallthru
      _
    // Predicated region
    $region38: #{tpu_custom_call.1} parent=1 // pred_check
      _
    $region39: #{tpu_custom_call.1} parent=1 // pred_check_branch
      %368 = sbr.rel (0) target = $region41
    $region40: #{tpu_custom_call.1} parent=1 // pred_region
      %370 = dma.done [#allocation4], 256
    $region41: #{tpu_custom_call.1} parent=1 // pred_fallthru
      _
    %371 = vsyncpa [#allocation3], 1
    %372 = vsyncpa [#allocation6], 1
    %373 = vsyncpa [#allocation9], 1
    %374 = vsyncpa [#allocation4], 1

</llo_original>
